<compile_context>
chip_gen: v7x
topology: tpu7x:2x2x1
jax: 0.10.0
libtpu: 0.0.40
codegen_flags: <defaults>
</compile_context>

<pallas_src>
import jax
import jax.numpy as jnp
from jax.experimental import pallas as pl
from jax.experimental.pallas import tpu as pltpu


# ----------------------------------------------------------------------------
# Packed parameter-slab layout (fixed: every feature dim padded to 128 lanes).
# All row offsets are multiples of 8, so in-kernel static slices are aligned
# to the (8, 128) VMEM tiling and are free views.
# ----------------------------------------------------------------------------
_LANES = 128
_W1_ROWS = 128          # obs_dim padded to 128
_BIAS_ROWS = 8          # row 0 = b1, row 1 = b2, row 2 = b3, rest zero
_W2_ROWS = 128          # input_size padded to 128
_W3_ROWS = 128          # hidden_size padded to 128
_OFF_W1 = 0
_OFF_B = _OFF_W1 + _W1_ROWS      # 128
_OFF_W2 = _OFF_B + _BIAS_ROWS    # 136
_OFF_W3 = _OFF_W2 + _W2_ROWS     # 264
_P_ROWS = _OFF_W3 + _W3_ROWS     # 392


def _round_up(x, m):
    return ((x + m - 1) // m) * m


def _dqn_kernel(x_ref, p_ref, out_ref):
    """Fused 3-layer MLP on one (TB, 128) activation tile.

    x_ref:   [TB, 128]   padded activations (real obs in cols [0, obs_dim))
    p_ref:   [392, 128]  packed params (see layout constants above)
    out_ref: [TB, 128]   padded outputs (real Q-values in cols [0, out_size))
    """
    x = x_ref[...]

    # Static, tile-aligned sub-views of the packed parameter slab.
    w1 = p_ref[_OFF_W1:_OFF_W1 + _W1_ROWS, :]
    w2 = p_ref[_OFF_W2:_OFF_W2 + _W2_ROWS, :]
    w3 = p_ref[_OFF_W3:_OFF_W3 + _W3_ROWS, :]
    bias = p_ref[_OFF_B:_OFF_B + _BIAS_ROWS, :]      # aligned [8, 128] load
    b1 = bias[0:1, :]
    b2 = bias[1:2, :]
    b3 = bias[2:3, :]

    # Layer 1: Linear + sigmoid  (exp/reciprocal run on the otherwise-idle EUP)
    h1 = jax.nn.sigmoid(
        jnp.dot(x, w1, preferred_element_type=jnp.float32) + b1)
    # Layer 2: Linear + sigmoid
    h2 = jax.nn.sigmoid(
        jnp.dot(h1, w2, preferred_element_type=jnp.float32) + b2)
    # Output layer: Linear (no activation).  Lane-dense (128-wide) store.
    out = jnp.dot(h2, w3, preferred_element_type=jnp.float32) + b3
    out_ref[...] = out.astype(out_ref.dtype)


def pack_params(params):
    """Pack (pre-transposed) weights + biases into one [392, 128] f32 slab.

    params: w1 [obs, in], w2 [in, hid], w3 [hid, out]; b* [1, features].
    Padded columns/rows are zero; zero rows in the *next* layer's weights kill
    the sigmoid(0)=0.5 values produced in padded activation columns, so the
    real outputs are bit-identical to the unpadded computation.
    """
    def pad2(a, rows, cols):
        assert a.shape[0] <= rows and a.shape[1] <= cols, "dims must be <= 128"
        return jnp.zeros((rows, cols), jnp.float32).at[
            :a.shape[0], :a.shape[1]].set(a.astype(jnp.float32))

    w1 = pad2(params["w1"], _W1_ROWS, _LANES)
    w2 = pad2(params["w2"], _W2_ROWS, _LANES)
    w3 = pad2(params["w3"], _W3_ROWS, _LANES)

    bias = jnp.zeros((_BIAS_ROWS, _LANES), jnp.float32)
    bias = bias.at[0, :params["b1"].shape[-1]].set(params["b1"].reshape(-1))
    bias = bias.at[1, :params["b2"].shape[-1]].set(params["b2"].reshape(-1))
    bias = bias.at[2, :params["b3"].shape[-1]].set(params["b3"].reshape(-1))

    return jnp.concatenate([w1, bias, w2, w3], axis=0)   # [392, 128]


def dqn_forward(state, packed_params, output_size, *, tb_max=512):
    """state: [B, obs_dim] f32. packed_params: [392, 128] f32 slab."""
    B, obs = state.shape
    assert obs <= _LANES and output_size <= _LANES

    # Pick a batch tile: multiple of 8, at most tb_max; pad batch to fit.
    b_pad = _round_up(B, 8)
    if b_pad > tb_max:
        b_pad = _round_up(B, tb_max)
        tb = tb_max
    else:
        tb = b_pad
    grid = (b_pad // tb,)

    # Lane-dense padded activation slab (extra rows/cols are zero; the garbage
    # they produce is sliced off below).
    x = jnp.zeros((b_pad, _LANES), jnp.float32).at[:B, :obs].set(state)

    out = pl.pallas_call(
        _dqn_kernel,
        out_shape=jax.ShapeDtypeStruct((b_pad, _LANES), jnp.float32),
        grid=grid,
        in_specs=[
            pl.BlockSpec((tb, _LANES), lambda i: (i, 0)),        # activations
            pl.BlockSpec((_P_ROWS, _LANES), lambda i: (0, 0)),   # params (resident)
        ],
        out_specs=pl.BlockSpec((tb, _LANES), lambda i: (i, 0)),
        compiler_params=pltpu.CompilerParams(
            dimension_semantics=("parallel",)),   # v7x: shard batch over 2 TCs
    )(x, packed_params)

    return out[:B, :output_size]


def init_params(key, obs_dim, input_size, hidden_size, output_size):
    """Deterministic init mimicking nn.Linear's U(-1/sqrt(fan_in), 1/sqrt(fan_in)).

    Weights are stored already transposed to [in, out] (torch: y = x @ W.T + b)."""
    ks = jax.random.split(key, 6)

    def lin(kw, kb, fan_in, fan_out):
        bound = 1.0 / jnp.sqrt(jnp.float32(fan_in))
        w = jax.random.uniform(kw, (fan_in, fan_out), jnp.float32, -bound, bound)
        b = jax.random.uniform(kb, (1, fan_out), jnp.float32, -bound, bound)
        return w, b

    w1, b1 = lin(ks[0], ks[1], obs_dim, input_size)
    w2, b2 = lin(ks[2], ks[3], input_size, hidden_size)
    w3, b3 = lin(ks[4], ks[5], hidden_size, output_size)
    return {"w1": w1, "b1": b1, "w2": w2, "b2": b2, "w3": w3, "b3": b3}


def dqn_reference(state, p):
    """Pure-JAX reference for correctness checking."""
    h = jax.nn.sigmoid(state @ p["w1"] + p["b1"])
    h = jax.nn.sigmoid(h @ p["w2"] + p["b2"])
    return h @ p["w3"] + p["b3"]


# TODO(synk): Adam optimizer / MSELoss training step from the torch module are
# out of scope for the forward pass and are not implemented here.

if __name__ == "__main__":
    # LunarLander-style config: 8-dim observation, 4 actions, small hiddens.
    batch = 2
    obs_dim = 8          # self.inputs = (8,)
    input_size = 32
    hidden_size = 32
    output_size = 4

    key = jax.random.PRNGKey(0)
    k_params, k_state, k_big = jax.random.split(key, 3)
    params = init_params(k_params, obs_dim, input_size, hidden_size, output_size)
    packed = pack_params(params)

    # Small (inference-style) batch.
    state = jax.random.normal(k_state, (batch, obs_dim), jnp.float32)
    out = jax.block_until_ready(dqn_forward(state, packed, output_size))
    ref = dqn_reference(state, params)
    assert out.shape == (batch, output_size)
    assert jnp.allclose(out, ref, atol=1e-5, rtol=1e-5), "mismatch vs reference (B=2)"

    # Replay-buffer-style batch: exercises the batch-tiled (grid > 1) path.
    big_batch = 1024
    state_big = jax.random.normal(k_big, (big_batch, obs_dim), jnp.float32)
    out_big = jax.block_until_ready(dqn_forward(state_big, packed, output_size))
    ref_big = dqn_reference(state_big, params)
    assert out_big.shape == (big_batch, output_size)
    assert jnp.allclose(out_big, ref_big, atol=1e-5, rtol=1e-5), "mismatch (B=1024)"

    print("KERNEL_OK")
</pallas_src>

<mosaic_0001>
module attributes {stable_mosaic.version = 11 : i64} {
  func.func @_dqn_kernel(%arg0: i32, %arg1: memref<8x128xf32, #tpu.memory_space<vmem>>, %arg2: memref<392x128xf32, #tpu.memory_space<vmem>>, %arg3: memref<8x128xf32, #tpu.memory_space<vmem>>) attributes {dimension_semantics = [#tpu.dimension_semantics<parallel>], iteration_bounds = array<i64: 1>, scalar_prefetch = 0 : i64, scratch_operands = 0 : i64, tpu.core_type = #tpu.core_type<tc>, window_params = [{transform_indices = @transform_0, window_bounds = array<i64: 8, 128>}, {pipeline_mode = #tpu.pipeline_mode<synchronous>, transform_indices = @transform_1, window_bounds = array<i64: 392, 128>}, {transform_indices = @transform_2, window_bounds = array<i64: 8, 128>}]} {
    %c0 = arith.constant 0 : index
    %c0_0 = arith.constant 0 : index
    %0 = vector.load %arg1[%c0, %c0_0] : memref<8x128xf32, #tpu.memory_space<vmem>>, vector<8x128xf32>
    %c0_1 = arith.constant 0 : index
    %c0_2 = arith.constant 0 : index
    %1 = vector.load %arg2[%c0_1, %c0_2] : memref<392x128xf32, #tpu.memory_space<vmem>>, vector<128x128xf32>
    %c136 = arith.constant 136 : index
    %c0_3 = arith.constant 0 : index
    %2 = vector.load %arg2[%c136, %c0_3] : memref<392x128xf32, #tpu.memory_space<vmem>>, vector<128x128xf32>
    %c264 = arith.constant 264 : index
    %c0_4 = arith.constant 0 : index
    %3 = vector.load %arg2[%c264, %c0_4] : memref<392x128xf32, #tpu.memory_space<vmem>>, vector<128x128xf32>
    %c128 = arith.constant 128 : index
    %c0_5 = arith.constant 0 : index
    %4 = vector.load %arg2[%c128, %c0_5] : memref<392x128xf32, #tpu.memory_space<vmem>>, vector<8x128xf32>
    %5 = vector.extract_strided_slice %4 {offsets = [0, 0], sizes = [1, 128], strides = [1, 1]} : vector<8x128xf32> to vector<1x128xf32>
    %6 = vector.extract_strided_slice %4 {offsets = [1, 0], sizes = [1, 128], strides = [1, 1]} : vector<8x128xf32> to vector<1x128xf32>
    %7 = vector.extract_strided_slice %4 {offsets = [2, 0], sizes = [1, 128], strides = [1, 1]} : vector<8x128xf32> to vector<1x128xf32>
    %cst = arith.constant dense<0.000000e+00> : vector<8x128xf32>
    %8 = tpu.matmul %0, %1, %cst {dimension_numbers = #tpu.dot_dimension_numbers<[1], [0], [0], [1], [0, 0, 1, 1], [], []>} : vector<8x128xf32>, vector<128x128xf32>, vector<8x128xf32> -> vector<8x128xf32>
    %9 = vector.broadcast %5 : vector<1x128xf32> to vector<8x128xf32>
    %10 = arith.addf %8, %9 : vector<8x128xf32>
    %11 = arith.negf %10 : vector<8x128xf32>
    %12 = math.exp %11 : vector<8x128xf32>
    %cst_6 = arith.constant 1.000000e+00 : f32
    %13 = vector.broadcast %cst_6 : f32 to vector<8x128xf32>
    %14 = arith.addf %13, %12 : vector<8x128xf32>
    %15 = arith.divf %13, %14 : vector<8x128xf32>
    %cst_7 = arith.constant dense<0.000000e+00> : vector<8x128xf32>
    %16 = tpu.matmul %15, %2, %cst_7 {dimension_numbers = #tpu.dot_dimension_numbers<[1], [0], [0], [1], [0, 0, 1, 1], [], []>} : vector<8x128xf32>, vector<128x128xf32>, vector<8x128xf32> -> vector<8x128xf32>
    %17 = vector.broadcast %6 : vector<1x128xf32> to vector<8x128xf32>
    %18 = arith.addf %16, %17 : vector<8x128xf32>
    %19 = arith.negf %18 : vector<8x128xf32>
    %20 = math.exp %19 : vector<8x128xf32>
    %cst_8 = arith.constant 1.000000e+00 : f32
    %21 = vector.broadcast %cst_8 : f32 to vector<8x128xf32>
    %22 = arith.addf %21, %20 : vector<8x128xf32>
    %23 = arith.divf %21, %22 : vector<8x128xf32>
    %cst_9 = arith.constant dense<0.000000e+00> : vector<8x128xf32>
    %24 = tpu.matmul %23, %3, %cst_9 {dimension_numbers = #tpu.dot_dimension_numbers<[1], [0], [0], [1], [0, 0, 1, 1], [], []>} : vector<8x128xf32>, vector<128x128xf32>, vector<8x128xf32> -> vector<8x128xf32>
    %25 = vector.broadcast %7 : vector<1x128xf32> to vector<8x128xf32>
    %26 = arith.addf %24, %25 : vector<8x128xf32>
    %c0_10 = arith.constant 0 : index
    %c0_11 = arith.constant 0 : index
    %27 = vector.load %arg3[%c0_10, %c0_11] : memref<8x128xf32, #tpu.memory_space<vmem>>, vector<8x128xf32>
    tpu.vector_store %arg3[%c0_10, %c0_11], %26 {strides = array<i32>} : memref<8x128xf32, #tpu.memory_space<vmem>>, vector<8x128xf32>,
    return
  }
  func.func @transform_0(%arg0: i32) -> (i32, i32) {
    %c0_i32 = arith.constant 0 : i32
    %c0_i32_0 = arith.constant 0 : i32
    return %arg0, %c0_i32 : i32, i32
  }
  func.func @transform_1(%arg0: i32) -> (i32, i32) {
    %c0_i32 = arith.constant 0 : i32
    %c0_i32_0 = arith.constant 0 : i32
    %c0_i32_1 = arith.constant 0 : i32
    return %c0_i32, %c0_i32_0 : i32, i32
  }
  func.func @transform_2(%arg0: i32) -> (i32, i32) {
    %c0_i32 = arith.constant 0 : i32
    %c0_i32_0 = arith.constant 0 : i32
    return %arg0, %c0_i32 : i32, i32
  }
}

</mosaic_0001>

<llo_original>
// kernel: tpu_custom_call.1
$region0: #{tpu_custom_call.1}
  #allocation0 [shape = 'u32[]', space=smem, size = 0x4, offset = 0x4, fixed_abs, tag = 'smem constant byte address 0x4 - core index']
  #allocation1 [shape = 'u32[144,128]{1,0:T(1,128)}', space=vmem, size = 0x12000, scoped, tag = 'internal scratch']
  %s0 = inlined_call_operand.hbm [shape: f32[8,128], index: 0, kind: input, shape index: {}]
  %s1 = inlined_call_operand.hbm [shape: f32[392,128], index: 1, kind: input, shape index: {}]
  %s2 = inlined_call_operand.hbm [shape: f32[8,128], index: 2, kind: output, shape index: {}]
  %s3 = sld [smem:[#allocation0]]
  $region26: #{tpu_custom_call.1} parent=0
    _
  %s5 = ssub.s32 1, %s3
  %s6 = scalar_select 0, %s5, %s3
  $region1: #{tpu_custom_call.1} parent=0
    #allocation2 [shape = 'u8[4096]{0}', space=vmem, size = 0x1000, scoped, tag = 'input window, operand 0, single buffered']
    #allocation3 [shape = 's32[1]{0}', space=sflag, size = 0x4, scoped, tag = 'scoped memory for tpu_custom_call.1']
    #allocation4 [shape = 's32[1]{0}', space=sflag, size = 0x4, scoped, tag = 'scoped memory for tpu_custom_call.1']
    #allocation5 [shape = 'u8[200704]{0}', space=vmem, size = 0x31000, scoped, tag = 'input window, operand 1, single buffered']
    #allocation6 [shape = 's32[1]{0}', space=sflag, size = 0x4, scoped, tag = 'scoped memory for tpu_custom_call.1']
    #allocation7 [shape = 'u8[4096]{0}', space=vmem, size = 0x1000, scoped, tag = 'output window, operand 0, single buffered']
    %7 = vsyncpa [#allocation3], 0
    %8 = vsyncpa [#allocation6], 0
    %9 = vsyncpa [#allocation4], 0
    // Predicated region
    $region2: #{tpu_custom_call.1} parent=1 // pred_check
      _
    $region3: #{tpu_custom_call.1} parent=1 // pred_check_branch
      %11 = sbr.rel (0) target = $region5
    $region4: #{tpu_custom_call.1} parent=1 // pred_region
      %s13 = ssub.s32 128, 128
      %14 = vsyncadd [#allocation3], %s13
      %s16 = sshll.u32 [#allocation2], 4
      %s17 = int_to_ptr.vmem [resolvable:$true] %s16
      %19 = dma.hbm_to_vmem [thread:$0]  %s0, 128, %s17, [#allocation3]
    $region5: #{tpu_custom_call.1} parent=1 // pred_fallthru
      _
    // Predicated region
    $region6: #{tpu_custom_call.1} parent=1 // pred_check
      _
    $region7: #{tpu_custom_call.1} parent=1 // pred_check_branch
      %21 = sbr.rel (0) target = $region9
    $region8: #{tpu_custom_call.1} parent=1 // pred_region
      %s23 = ssub.s32 6272, 6272
      %24 = vsyncadd [#allocation6], %s23
      %s25 = sshll.u32 [#allocation5], 4
      %s26 = int_to_ptr.vmem [resolvable:$true] %s25
      %31 = dma.hbm_to_vmem [thread:$0]  %s1, 6272, %s26, [#allocation6], 128, 128, 8
    $region9: #{tpu_custom_call.1} parent=1 // pred_fallthru
      _
    // Predicated region
    $region10: #{tpu_custom_call.1} parent=1 // pred_check
      _
    $region11: #{tpu_custom_call.1} parent=1 // pred_check_branch
      %33 = sbr.rel (0) target = $region13
    $region12: #{tpu_custom_call.1} parent=1 // pred_region
      %34 = dma.done [#allocation3], 128
    $region13: #{tpu_custom_call.1} parent=1 // pred_fallthru
      _
    // Predicated region
    $region14: #{tpu_custom_call.1} parent=1 // pred_check
      _
    $region15: #{tpu_custom_call.1} parent=1 // pred_check_branch
      %36 = sbr.rel (0) target = $region17
    $region16: #{tpu_custom_call.1} parent=1 // pred_region
      %37 = dma.done [#allocation6], 6272
    $region17: #{tpu_custom_call.1} parent=1 // pred_fallthru
      _
    %v38 = vld [vmem:[#allocation2] sm:$0xff]
    %v39 = vld [vmem:[#allocation5] sm:$0xff]
    %v40 = vld [vmem:[#allocation5 + $0x8] sm:$0xff]
    %v41 = vld [vmem:[#allocation5 + $0x10] sm:$0xff]
    %v42 = vld [vmem:[#allocation5 + $0x18] sm:$0xff]
    %v43 = vld [vmem:[#allocation5 + $0x20] sm:$0xff]
    %v44 = vld [vmem:[#allocation5 + $0x28] sm:$0xff]
    %v45 = vld [vmem:[#allocation5 + $0x30] sm:$0xff]
    %v46 = vld [vmem:[#allocation5 + $0x38] sm:$0xff]
    %v47 = vld [vmem:[#allocation5 + $0x40] sm:$0xff]
    %v48 = vld [vmem:[#allocation5 + $0x48] sm:$0xff]
    %v49 = vld [vmem:[#allocation5 + $0x50] sm:$0xff]
    %v50 = vld [vmem:[#allocation5 + $0x58] sm:$0xff]
    %v51 = vld [vmem:[#allocation5 + $0x60] sm:$0xff]
    %v52 = vld [vmem:[#allocation5 + $0x68] sm:$0xff]
    %v53 = vld [vmem:[#allocation5 + $0x70] sm:$0xff]
    %v54 = vld [vmem:[#allocation5 + $0x78] sm:$0xff]
    %v55 = vld [vmem:[#allocation5 + $0x88] sm:$0xff]
    %v56 = vld [vmem:[#allocation5 + $0x90] sm:$0xff]
    %v57 = vld [vmem:[#allocation5 + $0x98] sm:$0xff]
    %v58 = vld [vmem:[#allocation5 + $0xa0] sm:$0xff]
    %v59 = vld [vmem:[#allocation5 + $0xa8] sm:$0xff]
    %v60 = vld [vmem:[#allocation5 + $0xb0] sm:$0xff]
    %v61 = vld [vmem:[#allocation5 + $0xb8] sm:$0xff]
    %v62 = vld [vmem:[#allocation5 + $0xc0] sm:$0xff]
    %v63 = vld [vmem:[#allocation5 + $0xc8] sm:$0xff]
    %v64 = vld [vmem:[#allocation5 + $0xd0] sm:$0xff]
    %v65 = vld [vmem:[#allocation5 + $0xd8] sm:$0xff]
    %v66 = vld [vmem:[#allocation5 + $0xe0] sm:$0xff]
    %v67 = vld [vmem:[#allocation5 + $0xe8] sm:$0xff]
    %v68 = vld [vmem:[#allocation5 + $0xf0] sm:$0xff]
    %v69 = vld [vmem:[#allocation5 + $0xf8] sm:$0xff]
    %v70 = vld [vmem:[#allocation5 + $0x100] sm:$0xff]
    %v71 = vld [vmem:[#allocation5 + $0x108] sm:$0xff]
    %v72 = vld [vmem:[#allocation5 + $0x110] sm:$0xff]
    %v73 = vld [vmem:[#allocation5 + $0x118] sm:$0xff]
    %v74 = vld [vmem:[#allocation5 + $0x120] sm:$0xff]
    %v75 = vld [vmem:[#allocation5 + $0x128] sm:$0xff]
    %v76 = vld [vmem:[#allocation5 + $0x130] sm:$0xff]
    %v77 = vld [vmem:[#allocation5 + $0x138] sm:$0xff]
    %v78 = vld [vmem:[#allocation5 + $0x140] sm:$0xff]
    %v79 = vld [vmem:[#allocation5 + $0x148] sm:$0xff]
    %v80 = vld [vmem:[#allocation5 + $0x150] sm:$0xff]
    %v81 = vld [vmem:[#allocation5 + $0x158] sm:$0xff]
    %v82 = vld [vmem:[#allocation5 + $0x160] sm:$0xff]
    %v83 = vld [vmem:[#allocation5 + $0x168] sm:$0xff]
    %v84 = vld [vmem:[#allocation5 + $0x170] sm:$0xff]
    %v85 = vld [vmem:[#allocation5 + $0x178] sm:$0xff]
    %v86 = vld [vmem:[#allocation5 + $0x180] sm:$0xff]
    %v87 = vld [vmem:[#allocation5 + $0x80] sm:$0xff]
    %v88 = vlaneseq
    %v89 = vshrl.u32 %v88, 7
    %v90 = vsub.s32 0, %v89
    %v91 = vrot.slane %v87, %v90
    %92 = vmatprep.subr.mxu0 0.0
    %93 = vmatpush1.msra.mxu0 %v39
    %94 = vmatprep.subr.mxu0 0.0
    %95 = vmatpush1.msra.mxu0 %v40
    %96 = vmatprep.subr.mxu0 0.0
    %97 = vmatpush1.msra.mxu0 %v41
    %98 = vmatprep.subr.mxu0 0.0
    %99 = vmatpush1.msra.mxu0 %v42
    %100 = vmatprep.subr.mxu0 0.0
    %101 = vmatpush1.msra.mxu0 %v43
    %102 = vmatprep.subr.mxu0 0.0
    %103 = vmatpush1.msra.mxu0 %v44
    %104 = vmatprep.subr.mxu0 0.0
    %105 = vmatpush1.msra.mxu0 %v45
    %106 = vmatprep.subr.mxu0 0.0
    %107 = vmatpush1.msra.mxu0 %v46
    %108 = vmatprep.subr.mxu0 0.0
    %109 = vmatpush1.msra.mxu0 %v47
    %110 = vmatprep.subr.mxu0 0.0
    %111 = vmatpush1.msra.mxu0 %v48
    %112 = vmatprep.subr.mxu0 0.0
    %113 = vmatpush1.msra.mxu0 %v49
    %114 = vmatprep.subr.mxu0 0.0
    %115 = vmatpush1.msra.mxu0 %v50
    %116 = vmatprep.subr.mxu0 0.0
    %117 = vmatpush1.msra.mxu0 %v51
    %118 = vmatprep.subr.mxu0 0.0
    %119 = vmatpush1.msra.mxu0 %v52
    %120 = vmatprep.subr.mxu0 0.0
    %121 = vmatpush1.msra.mxu0 %v53
    %122 = vmatprep.subr.mxu0 0.0
    %123 = vmatpush1.msra.mxu0 %v54
    %124 = vmatprep.subr.mxu0 0.0
    %125 = vmatpush1.msra.mxu0 0.0
    %126 = vmatprep.subr.mxu0 0.0
    %127 = vmatpush1.msra.mxu0 0.0
    %128 = vmatprep.subr.mxu0 0.0
    %129 = vmatpush1.msra.mxu0 0.0
    %130 = vmatprep.subr.mxu0 0.0
    %131 = vmatpush1.msra.mxu0 0.0
    %132 = vmatprep.subr.mxu0 0.0
    %133 = vmatpush1.msra.mxu0 0.0
    %134 = vmatprep.subr.mxu0 0.0
    %135 = vmatpush1.msra.mxu0 0.0
    %136 = vmatprep.subr.mxu0 0.0
    %137 = vmatpush1.msra.mxu0 0.0
    %138 = vmatprep.subr.mxu0 0.0
    %139 = vmatpush1.msra.mxu0 0.0
    %140 = vmatprep.subr.mxu0 0.0
    %141 = vmatpush1.msra.mxu0 0.0
    %142 = vmatprep.subr.mxu0 0.0
    %143 = vmatpush1.msra.mxu0 0.0
    %144 = vmatprep.subr.mxu0 0.0
    %145 = vmatpush1.msra.mxu0 0.0
    %146 = vmatprep.subr.mxu0 0.0
    %147 = vmatpush1.msra.mxu0 0.0
    %148 = vmatprep.subr.mxu0 0.0
    %149 = vmatpush1.msra.mxu0 0.0
    %150 = vmatprep.subr.mxu0 0.0
    %151 = vmatpush1.msra.mxu0 0.0
    %152 = vmatprep.subr.mxu0 0.0
    %153 = vmatpush1.msra.mxu0 0.0
    %154 = vmatprep.subr.mxu0 0.0
    %155 = vmatpush1.msra.mxu0 0.0
    %156 = vmatprep.mubr.f32.mxu0 0.0
    %157 = vmatmul.mubr.f32.gmra.mrb[0].mxu0 %v38
    %v158 = vpop.f32.mrb[0].mxu0
    %v159 = vadd.f32 %v91, %v158
    %v160 = vpop.f32.mrb[0].mxu0
    %161 = vdwg.mxu0
    %v162 = vxor.u32 %v159, 2147483648
    %v163 = vmul.f32 %v162, 1.442695
    %v164 = vpow.pop %v163
    %v165 = vadd.f32 %v164, 1.0
    %v166 = vrcp.pop %v165
    %v167 = vmul.f32 1.0, %v166
    %v168 = vlaneseq
    %v169 = vshrl.u32 %v168, 7
    %v170 = vsub.s32 1, %v169
    %v171 = vrot.slane %v87, %v170
    %172 = vmatprep.subr.mxu0 0.0
    %173 = vmatpush1.msra.mxu0 %v55
    %174 = vmatprep.subr.mxu0 0.0
    %175 = vmatpush1.msra.mxu0 %v56
    %176 = vmatprep.subr.mxu0 0.0
    %177 = vmatpush1.msra.mxu0 %v57
    %178 = vmatprep.subr.mxu0 0.0
    %179 = vmatpush1.msra.mxu0 %v58
    %180 = vmatprep.subr.mxu0 0.0
    %181 = vmatpush1.msra.mxu0 %v59
    %182 = vmatprep.subr.mxu0 0.0
    %183 = vmatpush1.msra.mxu0 %v60
    %184 = vmatprep.subr.mxu0 0.0
    %185 = vmatpush1.msra.mxu0 %v61
    %186 = vmatprep.subr.mxu0 0.0
    %187 = vmatpush1.msra.mxu0 %v62
    %188 = vmatprep.subr.mxu0 0.0
    %189 = vmatpush1.msra.mxu0 %v63
    %190 = vmatprep.subr.mxu0 0.0
    %191 = vmatpush1.msra.mxu0 %v64
    %192 = vmatprep.subr.mxu0 0.0
    %193 = vmatpush1.msra.mxu0 %v65
    %194 = vmatprep.subr.mxu0 0.0
    %195 = vmatpush1.msra.mxu0 %v66
    %196 = vmatprep.subr.mxu0 0.0
    %197 = vmatpush1.msra.mxu0 %v67
    %198 = vmatprep.subr.mxu0 0.0
    %199 = vmatpush1.msra.mxu0 %v68
    %200 = vmatprep.subr.mxu0 0.0
    %201 = vmatpush1.msra.mxu0 %v69
    %202 = vmatprep.subr.mxu0 0.0
    %203 = vmatpush1.msra.mxu0 %v70
    %204 = vmatprep.subr.mxu0 0.0
    %205 = vmatpush1.msra.mxu0 0.0
    %206 = vmatprep.subr.mxu0 0.0
    %207 = vmatpush1.msra.mxu0 0.0
    %208 = vmatprep.subr.mxu0 0.0
    %209 = vmatpush1.msra.mxu0 0.0
    %210 = vmatprep.subr.mxu0 0.0
    %211 = vmatpush1.msra.mxu0 0.0
    %212 = vmatprep.subr.mxu0 0.0
    %213 = vmatpush1.msra.mxu0 0.0
    %214 = vmatprep.subr.mxu0 0.0
    %215 = vmatpush1.msra.mxu0 0.0
    %216 = vmatprep.subr.mxu0 0.0
    %217 = vmatpush1.msra.mxu0 0.0
    %218 = vmatprep.subr.mxu0 0.0
    %219 = vmatpush1.msra.mxu0 0.0
    %220 = vmatprep.subr.mxu0 0.0
    %221 = vmatpush1.msra.mxu0 0.0
    %222 = vmatprep.subr.mxu0 0.0
    %223 = vmatpush1.msra.mxu0 0.0
    %224 = vmatprep.subr.mxu0 0.0
    %225 = vmatpush1.msra.mxu0 0.0
    %226 = vmatprep.subr.mxu0 0.0
    %227 = vmatpush1.msra.mxu0 0.0
    %228 = vmatprep.subr.mxu0 0.0
    %229 = vmatpush1.msra.mxu0 0.0
    %230 = vmatprep.subr.mxu0 0.0
    %231 = vmatpush1.msra.mxu0 0.0
    %232 = vmatprep.subr.mxu0 0.0
    %233 = vmatpush1.msra.mxu0 0.0
    %234 = vmatprep.subr.mxu0 0.0
    %235 = vmatpush1.msra.mxu0 0.0
    %236 = vmatprep.mubr.f32.mxu0 0.0
    %237 = vmatmul.mubr.f32.gmra.mrb[0].mxu0 %v167
    %v238 = vpop.f32.mrb[0].mxu0
    %v239 = vadd.f32 %v171, %v238
    %v240 = vpop.f32.mrb[0].mxu0
    %241 = vdwg.mxu0
    %v242 = vxor.u32 %v239, 2147483648
    %v243 = vmul.f32 %v242, 1.442695
    %v244 = vpow.pop %v243
    %v245 = vadd.f32 %v244, 1.0
    %v246 = vrcp.pop %v245
    %v247 = vmul.f32 1.0, %v246
    %v248 = vlaneseq
    %v249 = vshrl.u32 %v248, 7
    %v250 = vsub.s32 2, %v249
    %v251 = vrot.slane %v87, %v250
    %252 = vmatprep.subr.mxu0 0.0
    %253 = vmatpush1.msra.mxu0 %v71
    %254 = vmatprep.subr.mxu0 0.0
    %255 = vmatpush1.msra.mxu0 %v72
    %256 = vmatprep.subr.mxu0 0.0
    %257 = vmatpush1.msra.mxu0 %v73
    %258 = vmatprep.subr.mxu0 0.0
    %259 = vmatpush1.msra.mxu0 %v74
    %260 = vmatprep.subr.mxu0 0.0
    %261 = vmatpush1.msra.mxu0 %v75
    %262 = vmatprep.subr.mxu0 0.0
    %263 = vmatpush1.msra.mxu0 %v76
    %264 = vmatprep.subr.mxu0 0.0
    %265 = vmatpush1.msra.mxu0 %v77
    %266 = vmatprep.subr.mxu0 0.0
    %267 = vmatpush1.msra.mxu0 %v78
    %268 = vmatprep.subr.mxu0 0.0
    %269 = vmatpush1.msra.mxu0 %v79
    %270 = vmatprep.subr.mxu0 0.0
    %271 = vmatpush1.msra.mxu0 %v80
    %272 = vmatprep.subr.mxu0 0.0
    %273 = vmatpush1.msra.mxu0 %v81
    %274 = vmatprep.subr.mxu0 0.0
    %275 = vmatpush1.msra.mxu0 %v82
    %276 = vmatprep.subr.mxu0 0.0
    %277 = vmatpush1.msra.mxu0 %v83
    %278 = vmatprep.subr.mxu0 0.0
    %279 = vmatpush1.msra.mxu0 %v84
    %280 = vmatprep.subr.mxu0 0.0
    %281 = vmatpush1.msra.mxu0 %v85
    %282 = vmatprep.subr.mxu0 0.0
    %283 = vmatpush1.msra.mxu0 %v86
    %284 = vmatprep.subr.mxu0 0.0
    %285 = vmatpush1.msra.mxu0 0.0
    %286 = vmatprep.subr.mxu0 0.0
    %287 = vmatpush1.msra.mxu0 0.0
    %288 = vmatprep.subr.mxu0 0.0
    %289 = vmatpush1.msra.mxu0 0.0
    %290 = vmatprep.subr.mxu0 0.0
    %291 = vmatpush1.msra.mxu0 0.0
    %292 = vmatprep.subr.mxu0 0.0
    %293 = vmatpush1.msra.mxu0 0.0
    %294 = vmatprep.subr.mxu0 0.0
    %295 = vmatpush1.msra.mxu0 0.0
    %296 = vmatprep.subr.mxu0 0.0
    %297 = vmatpush1.msra.mxu0 0.0
    %298 = vmatprep.subr.mxu0 0.0
    %299 = vmatpush1.msra.mxu0 0.0
    %300 = vmatprep.subr.mxu0 0.0
    %301 = vmatpush1.msra.mxu0 0.0
    %302 = vmatprep.subr.mxu0 0.0
    %303 = vmatpush1.msra.mxu0 0.0
    %304 = vmatprep.subr.mxu0 0.0
    %305 = vmatpush1.msra.mxu0 0.0
    %306 = vmatprep.subr.mxu0 0.0
    %307 = vmatpush1.msra.mxu0 0.0
    %308 = vmatprep.subr.mxu0 0.0
    %309 = vmatpush1.msra.mxu0 0.0
    %310 = vmatprep.subr.mxu0 0.0
    %311 = vmatpush1.msra.mxu0 0.0
    %312 = vmatprep.subr.mxu0 0.0
    %313 = vmatpush1.msra.mxu0 0.0
    %314 = vmatprep.subr.mxu0 0.0
    %315 = vmatpush1.msra.mxu0 0.0
    %316 = vmatprep.mubr.f32.mxu0 0.0
    %317 = vmatmul.mubr.f32.gmra.mrb[0].mxu0 %v247
    %v318 = vpop.f32.mrb[0].mxu0
    %v319 = vadd.f32 %v251, %v318
    %v320 = vpop.f32.mrb[0].mxu0
    %321 = vdwg.mxu0
    %322 = vst [vmem:[#allocation7] sm:$0xff] %v319
    // Predicated region
    $region18: #{tpu_custom_call.1} parent=1 // pred_check
      _
    $region19: #{tpu_custom_call.1} parent=1 // pred_check_branch
      %324 = sbr.rel (0) target = $region21
    $region20: #{tpu_custom_call.1} parent=1 // pred_region
      %s326 = ssub.s32 128, 128
      %327 = vsyncadd [#allocation4], %s326
      %s329 = sshll.u32 [#allocation7], 4
      %s330 = int_to_ptr.vmem [resolvable:$true] %s329
      %332 = dma.vmem_to_hbm [thread:$0]  %s330, 128, %s2, [#allocation4]
    $region21: #{tpu_custom_call.1} parent=1 // pred_fallthru
      _
    // Predicated region
    $region22: #{tpu_custom_call.1} parent=1 // pred_check
      _
    $region23: #{tpu_custom_call.1} parent=1 // pred_check_branch
      %334 = sbr.rel (0) target = $region25
    $region24: #{tpu_custom_call.1} parent=1 // pred_region
      %335 = dma.done [#allocation4], 128
    $region25: #{tpu_custom_call.1} parent=1 // pred_fallthru
      _
    %336 = vsyncpa [#allocation3], 1
    %337 = vsyncpa [#allocation6], 1
    %338 = vsyncpa [#allocation4], 1

</llo_original>
